<compile_context>
chip_gen: v7x
topology: tpu7x:2x2x1
jax: 0.10.0
libtpu: 0.0.40
codegen_flags: <defaults>
</compile_context>

<pallas_src>
import functools
import math

import jax
import jax.numpy as jnp
from jax.experimental import pallas as pl
from jax.experimental.pallas import tpu as pltpu


def _ray_dirs_kernel(b_ref, dirs_ref, *, resolution, tile_m):
    # grid = (N, num_tiles); this invocation produces the (3, tile_m) slab of
    # normalized ray directions for rays [t*tile_m, (t+1)*tile_m) of camera n.
    t = pl.program_id(1)
    m_idx = t * tile_m + jax.lax.broadcasted_iota(jnp.int32, (1, tile_m), 1)

    # pixel coordinates (torch.meshgrid('ij') + flip(0) + row-major flatten):
    #   x_cam[m] = (m % res + 0.5)/res ,  y_cam[m] = (m // res + 0.5)/res
    if resolution & (resolution - 1) == 0:
        # power-of-two resolution: exact shift/mask, no integer div on the VPU
        shift = resolution.bit_length() - 1
        col = (m_idx & (resolution - 1)).astype(jnp.float32)
        row = (m_idx >> shift).astype(jnp.float32)
    else:
        # TODO(synk): non-pow2 resolutions keep exact integer div/mod; a float
        # reciprocal trick can misround at row boundaries for large res.
        row_i = m_idx // resolution
        col = (m_idx - row_i * resolution).astype(jnp.float32)
        row = row_i.astype(jnp.float32)

    inv_res = jnp.float32(1.0 / resolution)
    x = (col + jnp.float32(0.5)) * inv_res          # (1, tile_m)
    y = (row + jnp.float32(0.5)) * inv_res          # (1, tile_m)

    # Pre-folded per-camera coefficients: dirs_unnorm_k = B[k,0]*x + B[k,1]*y + B[k,2]
    b00 = b_ref[0, 0, 0]; b01 = b_ref[0, 0, 1]; b02 = b_ref[0, 0, 2]
    b10 = b_ref[0, 1, 0]; b11 = b_ref[0, 1, 1]; b12 = b_ref[0, 1, 2]
    b20 = b_ref[0, 2, 0]; b21 = b_ref[0, 2, 1]; b22 = b_ref[0, 2, 2]

    d0 = b00 * x + b01 * y + b02
    d1 = b10 * x + b11 * y + b12
    d2 = b20 * x + b21 * y + b22

    # F.normalize(..., dim, eps=1e-12):  d / max(||d||, 1e-12)
    #   == d * rsqrt(max(sum d^2, 1e-24))
    sumsq = d0 * d0 + d1 * d1 + d2 * d2
    inv = jax.lax.rsqrt(jnp.maximum(sumsq, jnp.float32(1e-24)))

    dirs_ref[0, 0:1, :] = d0 * inv
    dirs_ref[0, 1:2, :] = d1 * inv
    dirs_ref[0, 2:3, :] = d2 * inv


def _choose_tile_m(M, N, max_tile=8192):
    """Pick ray-tile width (lane dim). Prefer the largest multiple of 128 that
    divides M (no padding, unmasked lane-dense stores), capped at max_tile."""
    if M <= max_tile:
        tile = M
        if N == 1:
            # v7x has 2 TensorCores: keep >=2 'parallel' grid blocks when the
            # batch axis provides no parallelism.
            for parts in (2, 4):
                if M % (parts * 128) == 0:
                    tile = M // parts
                    break
        return tile
    for tile in range(max_tile - max_tile % 128, 127, -128):
        if M % tile == 0:
            return tile
    return max_tile  # ragged M: wrapper pads up to a multiple of tile


def ray_sampler(cam2world_matrix, intrinsics, resolution,
                camera_orien_matrix=None, max_tile=8192, channel_major=False):
    """Returns (ray_origins (N, M, 3), ray_dirs (N, M, 3)), M = resolution**2.

    If channel_major=True, returns (cam_locs (N, 3), ray_dirs (N, 3, M)) so
    downstream ops can consume the lane-dense layout without a transpose.
    """
    cam2world_matrix = cam2world_matrix.astype(jnp.float32)
    intrinsics = intrinsics.astype(jnp.float32)

    N = cam2world_matrix.shape[0]
    M = resolution ** 2

    # PyTorch spec: ray origins / the direction offset use the ORIGINAL
    # translation even when camera_orien_matrix is supplied.
    t_orig = cam2world_matrix[:, :3, 3]                   # (N, 3)
    if camera_orien_matrix is not None:
        combined = jnp.matmul(cam2world_matrix,
                              camera_orien_matrix.astype(jnp.float32))
    else:
        combined = cam2world_matrix
    R = combined[:, :3, :3]
    t_comb = combined[:, :3, 3]

    # Fold intrinsics lift + rotation into one per-camera 3x3:
    #   [x_lift, y_lift, 1]^T = L @ [x_cam, y_cam, 1]^T
    #   dirs_unnorm = R @ [x_lift, y_lift, 1]^T + (t_comb - t_orig)
    #               = B @ [x_cam, y_cam, 1]^T   with the delta folded into B[:, :, 2]
    fx = intrinsics[:, 0, 0]
    fy = intrinsics[:, 1, 1]
    cx = intrinsics[:, 0, 2]
    cy = intrinsics[:, 1, 2]
    sk = intrinsics[:, 0, 1]
    zeros = jnp.zeros_like(fx)
    ones = jnp.ones_like(fx)
    L = jnp.stack([
        jnp.stack([1.0 / fx, -sk / (fx * fy), (cy * sk / fy - cx) / fx], axis=-1),
        jnp.stack([zeros, 1.0 / fy, -cy / fy], axis=-1),
        jnp.stack([zeros, zeros, ones], axis=-1),
    ], axis=1)                                            # (N, 3, 3)
    B = jnp.einsum("nij,njk->nik", R, L)                  # (N, 3, 3)
    B = B.at[:, :, 2].add(t_comb - t_orig)                # constant translation delta

    tile_m = _choose_tile_m(M, N, max_tile)
    num_tiles = (M + tile_m - 1) // tile_m
    M_pad = num_tiles * tile_m

    kernel = functools.partial(_ray_dirs_kernel,
                               resolution=resolution, tile_m=tile_m)

    dirs_cm = pl.pallas_call(
        kernel,
        out_shape=jax.ShapeDtypeStruct((N, 3, M_pad), jnp.float32),
        grid_spec=pltpu.PrefetchScalarGridSpec(
            num_scalar_prefetch=0,
            grid=(N, num_tiles),
            in_specs=[pl.BlockSpec((1, 3, 3), lambda n, t: (n, 0, 0))],
            out_specs=pl.BlockSpec((1, 3, tile_m), lambda n, t: (n, 0, t)),
        ),
        compiler_params=pltpu.CompilerParams(
            dimension_semantics=("parallel", "parallel")),
    )(B)

    if M_pad != M:
        dirs_cm = dirs_cm[:, :, :M]

    if channel_major:
        return t_orig, dirs_cm

    # glue: PyTorch layout.  Origins are a pure broadcast (no kernel, no copy
    # of per-ray data); only dirs pay one transpose (N,3,M)->(N,M,3).
    ray_origins = jnp.broadcast_to(t_orig[:, None, :], (N, M, 3))
    ray_dirs = jnp.transpose(dirs_cm, (0, 2, 1))
    return ray_origins, ray_dirs


def ray_sampler_ref(cam2world_matrix, intrinsics, resolution,
                    camera_orien_matrix=None):
    """Pure-JAX reference mirroring the PyTorch forward exactly."""
    N = cam2world_matrix.shape[0]
    M = resolution ** 2
    cam_locs_world = cam2world_matrix[:, :3, 3]           # ORIGINAL translation
    fx = intrinsics[:, 0, 0][:, None]
    fy = intrinsics[:, 1, 1][:, None]
    cx = intrinsics[:, 0, 2][:, None]
    cy = intrinsics[:, 1, 2][:, None]
    sk = intrinsics[:, 0, 1][:, None]

    ar = jnp.arange(resolution, dtype=jnp.float32)
    gi, gj = jnp.meshgrid(ar, ar, indexing="ij")
    uv = jnp.stack([gi, gj]) * (1.0 / resolution) + 0.5 / resolution
    uv = jnp.flip(uv, 0).reshape(2, -1).T                 # (M, 2)
    uv = jnp.broadcast_to(uv[None], (N, M, 2))
    x_cam = uv[:, :, 0]
    y_cam = uv[:, :, 1]
    z_cam = jnp.ones((N, M), jnp.float32)

    x_lift = (x_cam - cx + cy * sk / fy - sk * y_cam / fy) / fx * z_cam
    y_lift = (y_cam - cy) / fy * z_cam
    cam_rel = jnp.stack([x_lift, y_lift, z_cam, jnp.ones_like(z_cam)], -1)
    if camera_orien_matrix is not None:
        cam2world_matrix = jnp.matmul(cam2world_matrix, camera_orien_matrix)
    world_rel = jnp.einsum("nkc,nmc->nmk", cam2world_matrix, cam_rel)[:, :, :3]
    ray_dirs = world_rel - cam_locs_world[:, None, :]
    norm = jnp.linalg.norm(ray_dirs, axis=2, keepdims=True)
    ray_dirs = ray_dirs / jnp.maximum(norm, 1e-12)
    ray_origins = jnp.broadcast_to(cam_locs_world[:, None, :], (N, M, 3))
    return ray_origins, ray_dirs


if __name__ == "__main__":
    key = jax.random.PRNGKey(0)
    k1, k2, k3, k4 = jax.random.split(key, 4)

    def make_cameras(kr, kt, ki, N):
        rot = jnp.eye(3, dtype=jnp.float32)[None] + 0.1 * jax.random.normal(
            kr, (N, 3, 3), dtype=jnp.float32)
        trans = jax.random.normal(kt, (N, 3, 1), dtype=jnp.float32)
        bottom = jnp.broadcast_to(
            jnp.array([[[0.0, 0.0, 0.0, 1.0]]], dtype=jnp.float32), (N, 1, 4))
        cam2world = jnp.concatenate(
            [jnp.concatenate([rot, trans], axis=2), bottom], axis=1)  # (N,4,4)
        perturb = 0.05 * jax.random.normal(ki, (N, 3), dtype=jnp.float32)
        fx = 1.0 + perturb[:, 0]
        fy = 1.0 + perturb[:, 1]
        sk = 0.1 * perturb[:, 2]
        cx = jnp.full((N,), 0.5, jnp.float32)
        cy = jnp.full((N,), 0.5, jnp.float32)
        z = jnp.zeros((N,), jnp.float32)
        o = jnp.ones((N,), jnp.float32)
        intr = jnp.stack([
            jnp.stack([fx, sk, cx], axis=1),
            jnp.stack([z, fy, cy], axis=1),
            jnp.stack([z, z, o], axis=1),
        ], axis=1)                                         # (N, 3, 3)
        return cam2world, intr

    # Case 1: batch of 2 cameras, 16x16 rays (single ray-tile per camera).
    c2w, intr = make_cameras(k1, k2, k3, N=2)
    res = 16
    origins, dirs = ray_sampler(c2w, intr, res)
    origins = jax.block_until_ready(origins)
    dirs = jax.block_until_ready(dirs)
    o_ref, d_ref = ray_sampler_ref(c2w, intr, res)
    assert origins.shape == (2, res * res, 3)
    assert dirs.shape == (2, res * res, 3)
    assert jnp.allclose(origins, o_ref, atol=1e-5, rtol=1e-5)
    assert jnp.allclose(dirs, d_ref, atol=1e-5, rtol=1e-5)

    # Case 2: single camera, 32x32 rays -> ray axis split into 2 parallel tiles.
    c2w1, intr1 = make_cameras(k2, k3, k4, N=1)
    res1 = 32
    origins1, dirs1 = ray_sampler(c2w1, intr1, res1)
    dirs1 = jax.block_until_ready(dirs1)
    o_ref1, d_ref1 = ray_sampler_ref(c2w1, intr1, res1)
    assert jnp.allclose(origins1, o_ref1, atol=1e-5, rtol=1e-5)
    assert jnp.allclose(dirs1, d_ref1, atol=1e-5, rtol=1e-5)

    # Case 3: camera_orien_matrix with rotation AND translation — exercises
    # the spec's "origins from original matrix, points from combined" path.
    ang = 0.3
    rz = jnp.array([[math.cos(ang), -math.sin(ang), 0.0, 0.02],
                    [math.sin(ang), math.cos(ang), 0.0, -0.01],
                    [0.0, 0.0, 1.0, 0.03],
                    [0.0, 0.0, 0.0, 1.0]], dtype=jnp.float32)
    orien = jnp.broadcast_to(rz[None], (2, 4, 4))
    origins2, dirs2 = ray_sampler(c2w, intr, res, camera_orien_matrix=orien)
    dirs2 = jax.block_until_ready(dirs2)
    o_ref2, d_ref2 = ray_sampler_ref(c2w, intr, res, camera_orien_matrix=orien)
    assert jnp.allclose(origins2, o_ref2, atol=1e-5, rtol=1e-5)
    assert jnp.allclose(dirs2, d_ref2, atol=1e-5, rtol=1e-5)

    print("KERNEL_OK")
</pallas_src>

<mosaic_0001>
module attributes {stable_mosaic.version = 11 : i64} {
  func.func @_ray_dirs_kernel(%arg0: i32, %arg1: i32, %arg2: memref<1x3x3xf32, #tpu.memory_space<vmem>>, %arg3: memref<1x3x256xf32, #tpu.memory_space<vmem>>) attributes {dimension_semantics = [#tpu.dimension_semantics<parallel>, #tpu.dimension_semantics<parallel>], iteration_bounds = array<i64: 2, 1>, scalar_prefetch = 0 : i64, scratch_operands = 0 : i64, tpu.core_type = #tpu.core_type<tc>, window_params = [{transform_indices = @transform_0, window_bounds = array<i64: 1, 3, 3>}, {transform_indices = @transform_1, window_bounds = array<i64: 1, 3, 256>}]} {
    %c256_i32 = arith.constant 256 : i32
    %0 = arith.muli %arg1, %c256_i32 : i32
    %1 = tpu.iota {dimensions = array<i32: 1>} : vector<1x256xi32>
    %2 = vector.broadcast %0 : i32 to vector<1x256xi32>
    %3 = arith.addi %2, %1 : vector<1x256xi32>
    %c15_i32 = arith.constant 15 : i32
    %4 = vector.broadcast %c15_i32 : i32 to vector<1x256xi32>
    %5 = arith.andi %3, %4 : vector<1x256xi32>
    %6 = arith.sitofp %5 : vector<1x256xi32> to vector<1x256xf32>
    %c4_i32 = arith.constant 4 : i32
    %7 = vector.broadcast %c4_i32 : i32 to vector<1x256xi32>
    %8 = arith.shrsi %3, %7 : vector<1x256xi32>
    %9 = arith.sitofp %8 : vector<1x256xi32> to vector<1x256xf32>
    %cst = arith.constant 5.000000e-01 : f32
    %10 = vector.broadcast %cst : f32 to vector<1x256xf32>
    %11 = arith.addf %6, %10 : vector<1x256xf32>
    %cst_0 = arith.constant 6.250000e-02 : f32
    %12 = vector.broadcast %cst_0 : f32 to vector<1x256xf32>
    %13 = arith.mulf %11, %12 : vector<1x256xf32>
    %cst_1 = arith.constant 5.000000e-01 : f32
    %14 = vector.broadcast %cst_1 : f32 to vector<1x256xf32>
    %15 = arith.addf %9, %14 : vector<1x256xf32>
    %cst_2 = arith.constant 6.250000e-02 : f32
    %16 = vector.broadcast %cst_2 : f32 to vector<1x256xf32>
    %17 = arith.mulf %15, %16 : vector<1x256xf32>
    %c0 = arith.constant 0 : index
    %c0_3 = arith.constant 0 : index
    %c0_4 = arith.constant 0 : index
    %18 = vector.load %arg2[%c0, %c0_3, %c0_4] : memref<1x3x3xf32, #tpu.memory_space<vmem>>, vector<1x1x1xf32>
    %19 = vector.extract %18[0, 0, 0] : f32 from vector<1x1x1xf32>
    %c0_5 = arith.constant 0 : index
    %c0_6 = arith.constant 0 : index
    %c1 = arith.constant 1 : index
    %20 = vector.load %arg2[%c0_5, %c0_6, %c1] : memref<1x3x3xf32, #tpu.memory_space<vmem>>, vector<1x1x1xf32>
    %21 = vector.extract %20[0, 0, 0] : f32 from vector<1x1x1xf32>
    %c0_7 = arith.constant 0 : index
    %c0_8 = arith.constant 0 : index
    %c2 = arith.constant 2 : index
    %22 = vector.load %arg2[%c0_7, %c0_8, %c2] : memref<1x3x3xf32, #tpu.memory_space<vmem>>, vector<1x1x1xf32>
    %23 = vector.extract %22[0, 0, 0] : f32 from vector<1x1x1xf32>
    %c0_9 = arith.constant 0 : index
    %c1_10 = arith.constant 1 : index
    %c0_11 = arith.constant 0 : index
    %24 = vector.load %arg2[%c0_9, %c1_10, %c0_11] : memref<1x3x3xf32, #tpu.memory_space<vmem>>, vector<1x1x1xf32>
    %25 = vector.extract %24[0, 0, 0] : f32 from vector<1x1x1xf32>
    %c0_12 = arith.constant 0 : index
    %c1_13 = arith.constant 1 : index
    %c1_14 = arith.constant 1 : index
    %26 = vector.load %arg2[%c0_12, %c1_13, %c1_14] : memref<1x3x3xf32, #tpu.memory_space<vmem>>, vector<1x1x1xf32>
    %27 = vector.extract %26[0, 0, 0] : f32 from vector<1x1x1xf32>
    %c0_15 = arith.constant 0 : index
    %c1_16 = arith.constant 1 : index
    %c2_17 = arith.constant 2 : index
    %28 = vector.load %arg2[%c0_15, %c1_16, %c2_17] : memref<1x3x3xf32, #tpu.memory_space<vmem>>, vector<1x1x1xf32>
    %29 = vector.extract %28[0, 0, 0] : f32 from vector<1x1x1xf32>
    %c0_18 = arith.constant 0 : index
    %c2_19 = arith.constant 2 : index
    %c0_20 = arith.constant 0 : index
    %30 = vector.load %arg2[%c0_18, %c2_19, %c0_20] : memref<1x3x3xf32, #tpu.memory_space<vmem>>, vector<1x1x1xf32>
    %31 = vector.extract %30[0, 0, 0] : f32 from vector<1x1x1xf32>
    %c0_21 = arith.constant 0 : index
    %c2_22 = arith.constant 2 : index
    %c1_23 = arith.constant 1 : index
    %32 = vector.load %arg2[%c0_21, %c2_22, %c1_23] : memref<1x3x3xf32, #tpu.memory_space<vmem>>, vector<1x1x1xf32>
    %33 = vector.extract %32[0, 0, 0] : f32 from vector<1x1x1xf32>
    %c0_24 = arith.constant 0 : index
    %c2_25 = arith.constant 2 : index
    %c2_26 = arith.constant 2 : index
    %34 = vector.load %arg2[%c0_24, %c2_25, %c2_26] : memref<1x3x3xf32, #tpu.memory_space<vmem>>, vector<1x1x1xf32>
    %35 = vector.extract %34[0, 0, 0] : f32 from vector<1x1x1xf32>
    %36 = vector.broadcast %19 : f32 to vector<1x256xf32>
    %37 = arith.mulf %36, %13 : vector<1x256xf32>
    %38 = vector.broadcast %21 : f32 to vector<1x256xf32>
    %39 = arith.mulf %38, %17 : vector<1x256xf32>
    %40 = arith.addf %37, %39 : vector<1x256xf32>
    %41 = vector.broadcast %23 : f32 to vector<1x256xf32>
    %42 = arith.addf %40, %41 : vector<1x256xf32>
    %43 = vector.broadcast %25 : f32 to vector<1x256xf32>
    %44 = arith.mulf %43, %13 : vector<1x256xf32>
    %45 = vector.broadcast %27 : f32 to vector<1x256xf32>
    %46 = arith.mulf %45, %17 : vector<1x256xf32>
    %47 = arith.addf %44, %46 : vector<1x256xf32>
    %48 = vector.broadcast %29 : f32 to vector<1x256xf32>
    %49 = arith.addf %47, %48 : vector<1x256xf32>
    %50 = vector.broadcast %31 : f32 to vector<1x256xf32>
    %51 = arith.mulf %50, %13 : vector<1x256xf32>
    %52 = vector.broadcast %33 : f32 to vector<1x256xf32>
    %53 = arith.mulf %52, %17 : vector<1x256xf32>
    %54 = arith.addf %51, %53 : vector<1x256xf32>
    %55 = vector.broadcast %35 : f32 to vector<1x256xf32>
    %56 = arith.addf %54, %55 : vector<1x256xf32>
    %57 = arith.mulf %42, %42 : vector<1x256xf32>
    %58 = arith.mulf %49, %49 : vector<1x256xf32>
    %59 = arith.addf %57, %58 : vector<1x256xf32>
    %60 = arith.mulf %56, %56 : vector<1x256xf32>
    %61 = arith.addf %59, %60 : vector<1x256xf32>
    %cst_27 = arith.constant 1.000000e-24 : f32
    %62 = vector.broadcast %cst_27 : f32 to vector<1x256xf32>
    %63 = arith.maximumf %61, %62 : vector<1x256xf32>
    %64 = math.rsqrt %63 : vector<1x256xf32>
    %65 = arith.mulf %42, %64 : vector<1x256xf32>
    %c0_28 = arith.constant 0 : index
    %c0_29 = arith.constant 0 : index
    %c0_30 = arith.constant 0 : index
    %66 = vector.load %arg3[%c0_28, %c0_29, %c0_30] : memref<1x3x256xf32, #tpu.memory_space<vmem>>, vector<1x1x256xf32>
    %67 = vector.shape_cast %66 : vector<1x1x256xf32> to vector<1x256xf32>
    %68 = vector.shape_cast %65 : vector<1x256xf32> to vector<1x1x256xf32>
    tpu.vector_store %arg3[%c0_28, %c0_29, %c0_30], %68 {strides = array<i32>} : memref<1x3x256xf32, #tpu.memory_space<vmem>>, vector<1x1x256xf32>,
    %69 = arith.mulf %49, %64 : vector<1x256xf32>
    %c0_31 = arith.constant 0 : index
    %c1_32 = arith.constant 1 : index
    %c0_33 = arith.constant 0 : index
    %70 = vector.load %arg3[%c0_31, %c1_32, %c0_33] : memref<1x3x256xf32, #tpu.memory_space<vmem>>, vector<1x1x256xf32>
    %71 = vector.shape_cast %70 : vector<1x1x256xf32> to vector<1x256xf32>
    %72 = vector.shape_cast %69 : vector<1x256xf32> to vector<1x1x256xf32>
    tpu.vector_store %arg3[%c0_31, %c1_32, %c0_33], %72 {strides = array<i32>} : memref<1x3x256xf32, #tpu.memory_space<vmem>>, vector<1x1x256xf32>,
    %73 = arith.mulf %56, %64 : vector<1x256xf32>
    %c0_34 = arith.constant 0 : index
    %c2_35 = arith.constant 2 : index
    %c0_36 = arith.constant 0 : index
    %74 = vector.load %arg3[%c0_34, %c2_35, %c0_36] : memref<1x3x256xf32, #tpu.memory_space<vmem>>, vector<1x1x256xf32>
    %75 = vector.shape_cast %74 : vector<1x1x256xf32> to vector<1x256xf32>
    %76 = vector.shape_cast %73 : vector<1x256xf32> to vector<1x1x256xf32>
    tpu.vector_store %arg3[%c0_34, %c2_35, %c0_36], %76 {strides = array<i32>} : memref<1x3x256xf32, #tpu.memory_space<vmem>>, vector<1x1x256xf32>,
    return
  }
  func.func @transform_0(%arg0: i32, %arg1: i32) -> (i32, i32, i32) {
    %c0_i32 = arith.constant 0 : i32
    %c0_i32_0 = arith.constant 0 : i32
    %c0_i32_1 = arith.constant 0 : i32
    return %arg0, %c0_i32, %c0_i32_0 : i32, i32, i32
  }
  func.func @transform_1(%arg0: i32, %arg1: i32) -> (i32, i32, i32) {
    %c0_i32 = arith.constant 0 : i32
    %c0_i32_0 = arith.constant 0 : i32
    return %arg0, %c0_i32, %arg1 : i32, i32, i32
  }
}

</mosaic_0001>

<llo_original>
// kernel: tpu_custom_call.1
$region0: #{tpu_custom_call.1}
  #allocation0 [shape = 'u32[]', space=smem, size = 0x4, offset = 0x4, fixed_abs, tag = 'smem constant byte address 0x4 - core index']
  #allocation1 [shape = 'u32[144,128]{1,0:T(1,128)}', space=vmem, size = 0x12000, scoped, tag = 'internal scratch']
  %s0 = inlined_call_operand.vmem [shape: f32[2,3,3], index: 0, kind: input, shape index: {}]
  %s1 = inlined_call_operand.vmem [shape: f32[2,3,256], index: 1, kind: output, shape index: {}]
  %s2 = sld [smem:[#allocation0]]
  $region37: #{tpu_custom_call.1} parent=0
    _
  %s4 = ssub.s32 1, %s2
  %s5 = scalar_select 0, %s4, %s2
  loop: start=0, step=1, limit=4
  $region2: #{tpu_custom_call.1} parent=0 // loop_pre_header
    _
  $region3: #{tpu_custom_call.1} parent=0 // loop_header
    %s7 = sphi 0, %s11
    %p8 = scmp.ge.s32.totalorder %s7, 4
    %s14 = sphi 0, %s26
    %s15 = sphi 0, %s22
    %s16 = sphi 0, %s14
    %s17 = sphi 0, %s15
    %s18 = sphi 0, %s16
    %s19 = sphi 0, %s17
    %s29 = sphi 0, %s31
    %s32 = sphi 0, %s29
    %s33 = sphi 0, %s32
    %s49 = sphi 0, %s33
    %s57 = sphi 0, %s59
    %s60 = sphi 0, %s57
    %s61 = sphi 0, %s60
    %s77 = sphi 0, %s61
  $region4: #{tpu_custom_call.1} parent=0 // loop_header_branch
    %10 = sbr.rel (%p8) target = $region8
  $region5: #{tpu_custom_call.1} parent=0 // loop_body
    %s12 = ssub.s32 %s7, 1
    %s13 = ssub.s32 %s7, 2
    %s20 = sadd.s32 1, %s15
    %p21 = scmp.ge.s32.totalorder %s20, 1
    %s22 = scalar_select %p21, 0, %s20
    %s23 = sadd.s32 1, %s14
    %s24 = scalar_select %p21, %s23, %s14
    %p25 = scmp.ge.s32.totalorder %s24, 2
    %s26 = scalar_select %p25, 0, %s24
    %s27 = ssub.s32 %s14, %s26
    %p28 = scmp.eq.s32.totalorder %s27, 0
    %s30 = sadd.s32 %s29, 1
    %s31 = scalar_select %p28, %s29, %s30
    %p34 = pneg %p28
    %p35 = scmp.eq.s32.totalorder %s7, 1
    %p36 = por %p34, %p35
    %p37 = scmp.ne.s32.totalorder %s29, %s32
    %p38 = scmp.eq.s32.totalorder %s7, 0
    %p39 = por %p37, %p38
    %p40 = scmp.ne.s32.totalorder %s29, %s32
    %p41 = scmp.eq.s32.totalorder %s12, 1
    %p42 = por %p40, %p41
    %p43 = scmp.ne.s32.totalorder %s32, %s33
    %p44 = scmp.eq.s32.totalorder %s12, 0
    %p45 = por %p43, %p44
    %p46 = scmp.ne.s32.totalorder %s32, %s33
    %p47 = scmp.eq.s32.totalorder %s13, 1
    %p48 = por %p46, %p47
    %p50 = scmp.ne.s32.totalorder %s33, %s49
    %p51 = scmp.eq.s32.totalorder %s13, 0
    %p52 = por %p50, %p51
    %s53 = ssub.s32 %s14, %s26
    %s54 = ssub.s32 %s15, %s22
    %s55 = sor.u32 %s53, %s54
    %p56 = scmp.eq.s32.totalorder %s55, 0
    %s58 = sadd.s32 %s57, 1
    %s59 = scalar_select %p56, %s57, %s58
    %p62 = pneg %p56
    %p63 = scmp.eq.s32.totalorder %s7, 1
    %p64 = por %p62, %p63
    %p65 = scmp.ne.s32.totalorder %s57, %s60
    %p66 = scmp.eq.s32.totalorder %s7, 0
    %p67 = por %p65, %p66
    %p68 = scmp.ne.s32.totalorder %s57, %s60
    %p69 = scmp.eq.s32.totalorder %s12, 1
    %p70 = por %p68, %p69
    %p71 = scmp.ne.s32.totalorder %s60, %s61
    %p72 = scmp.eq.s32.totalorder %s12, 0
    %p73 = por %p71, %p72
    %p74 = scmp.ne.s32.totalorder %s60, %s61
    %p75 = scmp.eq.s32.totalorder %s13, 1
    %p76 = por %p74, %p75
    %p78 = scmp.ne.s32.totalorder %s61, %s77
    %p79 = scmp.eq.s32.totalorder %s13, 0
    %p80 = por %p78, %p79
    %p81 = scmp.le.s32.totalorder 1, %s7
    %p82 = scmp.lt.s32.totalorder %s7, 3
    %p83 = pnand %p81, %p82
    %p84 = pneg %p83
    // Predicated region
    $region9: #{tpu_custom_call.1} parent=5 // pred_check
      _
    $region10: #{tpu_custom_call.1} parent=5 // pred_check_branch
      %86 = sbr.rel (%p83) target = $region12
    $region11: #{tpu_custom_call.1} parent=5 // pred_region
      %s87 = ssub.s32 %s7, 1
    $region12: #{tpu_custom_call.1} parent=5 // pred_fallthru
      _
    %p88 = scmp.lt.s32.totalorder %s7, 2
    // Predicated region
    $region13: #{tpu_custom_call.1} parent=5 // pred_check
      %p89 = pneg %p88
    $region14: #{tpu_custom_call.1} parent=5 // pred_check_branch
      %91 = sbr.rel (%p89) target = $region16
    $region15: #{tpu_custom_call.1} parent=5 // pred_region
      // Predicated region
      $region17: #{tpu_custom_call.1} parent=15 // pred_check
        %p92 = pneg %p39
      $region18: #{tpu_custom_call.1} parent=15 // pred_check_branch
        %94 = sbr.rel (%p92) target = $region20
      $region19: #{tpu_custom_call.1} parent=15 // pred_region
        %p95 = scmp.lt.s32.totalorder %s14, 1
        %s96 = scalar_select %p95, %s14, 1
        %s97 = smul.addr %s96, 4
        %s98 = scalar_lea.vmem %s0, %s97
      $region20: #{tpu_custom_call.1} parent=15 // pred_fallthru
        _
    $region16: #{tpu_custom_call.1} parent=5 // pred_fallthru
      _
    %p99 = scmp.le.s32.totalorder 1, %s7
    %p100 = scmp.lt.s32.totalorder %s7, 3
    %p101 = pnand %p99, %p100
    %p102 = pneg %p101
    // Predicated region
    $region21: #{tpu_custom_call.1} parent=5 // pred_check
      _
    $region22: #{tpu_custom_call.1} parent=5 // pred_check_branch
      %104 = sbr.rel (%p101) target = $region24
    $region23: #{tpu_custom_call.1} parent=5 // pred_region
      %s105 = ssub.s32 %s7, 1
      %p106 = scmp.lt.s32.totalorder %s16, 1
      %s107 = scalar_select %p106, %s16, 1
      %s108 = smul.addr %s107, 4
      %s109 = scalar_lea.vmem %s0, %s108
      %p110 = pneg %p45
      %p111 = pneg %p42
      %p112 = pneg %p73
      %p113 = pneg %p70
      %s114 = smul.u32 2, %s17
      %p115 = scmp.lt.s32.totalorder %s16, 1
      %s116 = scalar_select %p115, %s16, 1
      %p117 = scmp.lt.s32.totalorder %s114, 1
      %s118 = scalar_select %p117, %s114, 1
      %s119 = smul.addr %s116, 2
      %s120 = sadd.s32 %s118, %s119
      %s121 = smul.addr %s120, 4
      %s122 = scalar_lea.vmem %s1, %s121
      %p123 = scmp.lt.s32.totalorder %s16, 1
      %s124 = scalar_select %p123, %s16, 1
      %s125 = smul.addr %s124, 4
      %s126 = scalar_lea.vmem %s0, %s125
      %s127 = smul.u32 2, %s17
      %p128 = scmp.lt.s32.totalorder %s16, 1
      %s129 = scalar_select %p128, %s16, 1
      %p130 = scmp.lt.s32.totalorder %s127, 1
      %s131 = scalar_select %p130, %s127, 1
      %s132 = smul.addr %s129, 2
      %s133 = sadd.s32 %s131, %s132
      %s134 = smul.addr %s133, 4
      %s135 = scalar_lea.vmem %s1, %s134
      %s136 = smul.u32 2, %s17
      %s137 = smul.u32 %s17, 256
      %v138 = vlaneseq
      %v139 = vand.u32 %v138, 127
      %v140 = vadd.s32 %v139, 128
      %v141 = vstv %s137
      %v142 = vadd.s32 %v141, %v139
      %v143 = vadd.s32 %v141, %v140
      %v144 = vand.u32 %v142, 15
      %v145 = vand.u32 %v143, 15
      %v146 = vcvt.s32.f32 %v144
      %v147 = vcvt.s32.f32 %v145
      %v148 = vshra.s32 %v142, 4
      %v149 = vshra.s32 %v143, 4
      %v150 = vcvt.s32.f32 %v148
      %v151 = vcvt.s32.f32 %v149
      %v152 = vadd.f32 %v146, 0.5
      %v153 = vadd.f32 %v147, 0.5
      %v154 = vmul.f32 %v152, 0.0625
      %v155 = vmul.f32 %v153, 0.0625
      %v156 = vadd.f32 %v150, 0.5
      %v157 = vadd.f32 %v151, 0.5
      %v158 = vmul.f32 %v156, 0.0625
      %v159 = vmul.f32 %v157, 0.0625
      %v160 = vld [vmem:[%s126] sm:$0x1]
      %s161 = vtos %v160
      %163 = vrot.lane.b32.xlu0 %v160, 127
      %v164 = vpop.permute.xlu0 %163
      %s166 = vtos %v164
      %167 = vrot.lane.b32.xlu0 %v160, 126
      %v168 = vpop.permute.xlu0 %167
      %s170 = vtos %v168
      %v171 = vld [vmem:[%s126 + $0x1] sm:$0x1]
      %s172 = vtos %v171
      %174 = vrot.lane.b32.xlu0 %v171, 127
      %v175 = vpop.permute.xlu0 %174
      %s177 = vtos %v175
      %178 = vrot.lane.b32.xlu0 %v171, 126
      %v179 = vpop.permute.xlu0 %178
      %s181 = vtos %v179
      %v182 = vld [vmem:[%s126 + $0x2] sm:$0x1]
      %s183 = vtos %v182
      %185 = vrot.lane.b32.xlu0 %v182, 127
      %v186 = vpop.permute.xlu0 %185
      %s188 = vtos %v186
      %189 = vrot.lane.b32.xlu0 %v182, 126
      %v190 = vpop.permute.xlu0 %189
      %s192 = vtos %v190
      %v193 = vstv %s161
      %v194 = vmul.f32 %v193, %v154
      %v195 = vmul.f32 %v193, %v155
      %v196 = vstv %s166
      %v197 = vmul.f32 %v196, %v158
      %v198 = vmul.f32 %v196, %v159
      %v199 = vadd.f32 %v194, %v197
      %v200 = vadd.f32 %v195, %v198
      %v201 = vstv %s170
      %v202 = vadd.f32 %v199, %v201
      %v203 = vadd.f32 %v200, %v201
      %v204 = vstv %s172
      %v205 = vmul.f32 %v204, %v154
      %v206 = vmul.f32 %v204, %v155
      %v207 = vstv %s177
      %v208 = vmul.f32 %v207, %v158
      %v209 = vmul.f32 %v207, %v159
      %v210 = vadd.f32 %v205, %v208
      %v211 = vadd.f32 %v206, %v209
      %v212 = vstv %s181
      %v213 = vadd.f32 %v210, %v212
      %v214 = vadd.f32 %v211, %v212
      %v215 = vstv %s183
      %v216 = vmul.f32 %v215, %v154
      %v217 = vmul.f32 %v215, %v155
      %v218 = vstv %s188
      %v219 = vmul.f32 %v218, %v158
      %v220 = vmul.f32 %v218, %v159
      %v221 = vadd.f32 %v216, %v219
      %v222 = vadd.f32 %v217, %v220
      %v223 = vstv %s192
      %v224 = vadd.f32 %v221, %v223
      %v225 = vadd.f32 %v222, %v223
      %v226 = vmul.f32 %v202, %v202
      %v227 = vmul.f32 %v203, %v203
      %v228 = vmul.f32 %v213, %v213
      %v229 = vmul.f32 %v214, %v214
      %v230 = vadd.f32 %v226, %v228
      %v231 = vadd.f32 %v227, %v229
      %v232 = vmul.f32 %v224, %v224
      %v233 = vmul.f32 %v225, %v225
      %v234 = vadd.f32 %v230, %v232
      %v235 = vadd.f32 %v231, %v233
      %v236 = vmax.f32 %v234, 1e-24
      %v237 = vmax.f32 %v235, 1e-24
      %v238 = vrsqrt.pop %v236
      %v239 = vrsqrt.pop %v237
      %v240 = vmul.f32 %v202, %v238
      %v241 = vmul.f32 %v203, %v239
      %v244 = vcombine.low %v240, %v241
      %v246 = vunpack.c.l.s4 1966171168
      %v247 = vunpack.c.0.s8 %v246
      %v248 = vlaneseq
      %v249 = vshrl.u32 %v248, 7
      %v250 = vsub.s32 %v247, %v249
      %v251 = vrot.slane %v244, %v250
      %v253 = vunpack.c.l.s4 1966171168
      %v254 = vunpack.c.0.s8 %v253
      %v255 = vlaneseq
      %v256 = vshrl.u32 %v255, 7
      %v257 = vsub.s32 %v254, %v256
      %v258 = vrot.slane %v251, %v257
      %v260 = vlaneseq
      %vm261 = vcmp.ge.s32.totalorder %v260, 0
      %vm262 = vcmp.lt.s32.totalorder %v260, 256
      %vm263 = vmand %vm261, %vm262
      %264 = vst.msk [vmem:[%s135] ss:$4 sm:$0x3] %vm263, %v258
      %v265 = vmul.f32 %v213, %v238
      %v266 = vmul.f32 %v214, %v239
      %v269 = vcombine.low %v265, %v266
      %v271 = vunpack.c.l.s4 1966171168
      %v272 = vunpack.c.0.s8 %v271
      %v273 = vlaneseq
      %v274 = vshrl.u32 %v273, 7
      %v275 = vsub.s32 %v272, %v274
      %v276 = vrot.slane %v269, %v275
      %v278 = vunpack.c.l.s4 1966171168
      %v279 = vunpack.c.0.s8 %v278
      %v280 = vlaneseq
      %v281 = vshrl.u32 %v280, 7
      %v282 = vsub.s32 %v279, %v281
      %v283 = vrot.slane %v276, %v282
      %s285 = scalar_lea.vmem %s135, 1
      %286 = vst.msk [vmem:[%s285] ss:$4 sm:$0x3] %vm263, %v283
      %v287 = vmul.f32 %v224, %v238
      %v288 = vmul.f32 %v225, %v239
      %v291 = vcombine.low %v287, %v288
      %v293 = vunpack.c.l.s4 1966171168
      %v294 = vunpack.c.0.s8 %v293
      %v295 = vlaneseq
      %v296 = vshrl.u32 %v295, 7
      %v297 = vsub.s32 %v294, %v296
      %v298 = vrot.slane %v291, %v297
      %v300 = vunpack.c.l.s4 1966171168
      %v301 = vunpack.c.0.s8 %v300
      %v302 = vlaneseq
      %v303 = vshrl.u32 %v302, 7
      %v304 = vsub.s32 %v301, %v303
      %v305 = vrot.slane %v298, %v304
      %s307 = scalar_lea.vmem %s135, 2
      %308 = vst.msk [vmem:[%s307] ss:$4 sm:$0x3] %vm263, %v305
      %s309 = smul.u32 2, %s17
      %p310 = scmp.lt.s32.totalorder %s16, 1
      %s311 = scalar_select %p310, %s16, 1
      %p312 = scmp.lt.s32.totalorder %s309, 1
      %s313 = scalar_select %p312, %s309, 1
      %s314 = smul.addr %s311, 2
      %s315 = sadd.s32 %s313, %s314
      %s316 = smul.addr %s315, 4
      %s317 = scalar_lea.vmem %s1, %s316
      // Predicated region
      $region25: #{tpu_custom_call.1} parent=23 // pred_check
        %p318 = pneg %p70
      $region26: #{tpu_custom_call.1} parent=23 // pred_check_branch
        %320 = sbr.rel (%p318) target = $region28
      $region27: #{tpu_custom_call.1} parent=23 // pred_region
        %s321 = smul.u32 2, %s17
      $region28: #{tpu_custom_call.1} parent=23 // pred_fallthru
        _
    $region24: #{tpu_custom_call.1} parent=5 // pred_fallthru
      _
    %p322 = scmp.le.s32.totalorder 2, %s7
    // Predicated region
    $region29: #{tpu_custom_call.1} parent=5 // pred_check
      %p323 = pneg %p322
    $region30: #{tpu_custom_call.1} parent=5 // pred_check_branch
      %325 = sbr.rel (%p323) target = $region32
    $region31: #{tpu_custom_call.1} parent=5 // pred_region
      %s326 = ssub.s32 %s7, 2
      // Predicated region
      $region33: #{tpu_custom_call.1} parent=31 // pred_check
        %p327 = pneg %p76
      $region34: #{tpu_custom_call.1} parent=31 // pred_check_branch
        %329 = sbr.rel (%p327) target = $region36
      $region35: #{tpu_custom_call.1} parent=31 // pred_region
        %s330 = smul.u32 2, %s19
        %p331 = scmp.lt.s32.totalorder %s18, 1
        %s332 = scalar_select %p331, %s18, 1
        %p333 = scmp.lt.s32.totalorder %s330, 1
        %s334 = scalar_select %p333, %s330, 1
        %s335 = smul.addr %s332, 2
        %s336 = sadd.s32 %s334, %s335
        %s337 = smul.addr %s336, 4
        %s338 = scalar_lea.vmem %s1, %s337
      $region36: #{tpu_custom_call.1} parent=31 // pred_fallthru
        _
    $region32: #{tpu_custom_call.1} parent=5 // pred_fallthru
      _
  $region6: #{tpu_custom_call.1} parent=0 // loop_footer
    %s11 = sadd.s32 1, %s7
  $region7: #{tpu_custom_call.1} parent=0 // loop_footer_branch
    %6 = sbr.rel target = $region3
  $region8: #{tpu_custom_call.1} parent=0 // loop_exit
    _

</llo_original>
